<compile_context>
chip_gen: v7x
topology: tpu7x:2x2x1
jax: 0.10.0
libtpu: 0.0.40
codegen_flags: <defaults>
</compile_context>

<pallas_src>
import functools

import jax
import jax.numpy as jnp
from jax import lax
from jax.experimental import pallas as pl
from jax.experimental.pallas import tpu as pltpu

_VMEM_LIMIT = 48 * 1024 * 1024  # fits v5e/v6e/v7x scoped VMEM comfortably


def _pick_tile(n, pref):
    """Largest multiple-of-8 divisor of n that is <= pref (else n itself)."""
    if n <= pref:
        return n
    for t in range(min(pref, n), 7, -1):
        if n % t == 0 and t % 8 == 0:
            return t
    return n


# --------------------- Stage 1: fused QKV projection ---------------------
def _proj_kernel(c, x_ref, w_ref, q_ref, k_ref, v_ref):
    x = x_ref[0]          # (tproj, C)  input dtype
    w = w_ref[0]          # (C, 3c)     input dtype, Q columns pre-scaled
    qkv = jnp.dot(x, w, preferred_element_type=jnp.float32)   # (tproj, 3c)
    q_ref[0, 0] = qkv[:, :c].astype(q_ref.dtype)
    k_ref[0, 0] = qkv[:, c:2 * c].astype(k_ref.dtype)
    v_ref[0, 0] = qkv[:, 2 * c:].astype(v_ref.dtype)


def _qkv_projection(x, w_heads, num_heads, head_size, tproj):
    B, T, C = x.shape
    c = head_size
    nt = T // tproj
    out = jax.ShapeDtypeStruct((B, num_heads, T, c), x.dtype)
    return pl.pallas_call(
        functools.partial(_proj_kernel, c),
        out_shape=(out, out, out),
        grid=(B, nt, num_heads),
        in_specs=[
            pl.BlockSpec((1, tproj, C), lambda b, ti, h: (b, ti, 0)),
            pl.BlockSpec((1, C, 3 * c), lambda b, ti, h: (h, 0, 0)),
        ],
        out_specs=tuple(
            pl.BlockSpec((1, 1, tproj, c), lambda b, ti, h: (b, h, ti, 0))
            for _ in range(3)),
        compiler_params=pltpu.CompilerParams(
            dimension_semantics=("parallel", "parallel", "arbitrary"),
            vmem_limit_bytes=_VMEM_LIMIT),
    )(x, w_heads)


# ------------------ Stage 2: causal flash attention ------------------
def _flash_kernel(tq, tkv, q_ref, k_ref, v_ref, o_ref, m_sc, l_sc, acc_sc):
    qi = pl.program_id(2)
    ki = pl.program_id(3)

    @pl.when(ki == 0)
    def _init():
        m_sc[...] = jnp.full_like(m_sc, -jnp.inf)
        l_sc[...] = jnp.zeros_like(l_sc)
        acc_sc[...] = jnp.zeros_like(acc_sc)

    # Skip kv tiles that lie entirely above the causal diagonal (~2x flops).
    @pl.when(ki * tkv <= qi * tq + (tq - 1))
    def _compute():
        q = q_ref[0, 0]                                    # (tq, c), pre-scaled
        k = k_ref[0, 0]                                    # (tkv, c)
        v = v_ref[0, 0]                                    # (tkv, c)
        s = jnp.dot(q, k.T, preferred_element_type=jnp.float32)  # (tq, tkv)

        # In-kernel causal mask (no (T,T) mask array in HBM/VMEM).
        row = qi * tq + lax.broadcasted_iota(jnp.int32, (tq, tkv), 0)
        col = ki * tkv + lax.broadcasted_iota(jnp.int32, (tq, tkv), 1)
        s = jnp.where(col <= row, s, -jnp.inf)

        m_prev = m_sc[...]
        m_new = jnp.maximum(m_prev, jnp.max(s, axis=-1, keepdims=True))
        alpha = jnp.exp(m_prev - m_new)
        p = jnp.exp(s - m_new)
        l_sc[...] = alpha * l_sc[...] + jnp.sum(p, axis=-1, keepdims=True)
        acc_sc[...] = alpha * acc_sc[...] + jnp.dot(
            p.astype(v.dtype), v, preferred_element_type=jnp.float32)
        m_sc[...] = m_new

    @pl.when(ki == pl.num_programs(3) - 1)
    def _finalize():
        o_ref[0, 0] = (acc_sc[...] *
                       pl.reciprocal(l_sc[...], approx=True)).astype(o_ref.dtype)


def _flash_attention(q, k, v, tq, tkv):
    B, H, T, c = q.shape
    n_q = T // tq
    n_kv = T // tkv

    def q_map(b, h, qi, ki):
        return (b, h, qi, 0)

    def kv_map(b, h, qi, ki):
        # Clamp: fully-masked kv tiles map to the last useful block -> the
        # block index doesn't change, so Pallas skips the (wasted) DMA.
        last = (qi * tq + tq - 1) // tkv
        return (b, h, jnp.minimum(ki, last), 0)

    return pl.pallas_call(
        functools.partial(_flash_kernel, tq, tkv),
        out_shape=jax.ShapeDtypeStruct((B, H, T, c), q.dtype),
        grid=(B, H, n_q, n_kv),
        in_specs=[
            pl.BlockSpec((1, 1, tq, c), q_map),
            pl.BlockSpec((1, 1, tkv, c), kv_map),
            pl.BlockSpec((1, 1, tkv, c), kv_map),
        ],
        out_specs=pl.BlockSpec((1, 1, tq, c), q_map),
        scratch_shapes=[
            pltpu.VMEM((tq, 1), jnp.float32),   # m (running max)
            pltpu.VMEM((tq, 1), jnp.float32),   # l (running denom)
            pltpu.VMEM((tq, c), jnp.float32),   # acc
        ],
        compiler_params=pltpu.CompilerParams(
            dimension_semantics=("parallel", "parallel", "parallel",
                                 "arbitrary"),
            vmem_limit_bytes=_VMEM_LIMIT),
    )(q, k, v)


# ------------- Stage 3: head merge + output projection -------------
def _outproj_kernel(y_ref, w_ref, o_ref, acc_sc):
    h = pl.program_id(2)

    @pl.when(h == 0)
    def _init():
        acc_sc[...] = jnp.zeros_like(acc_sc)

    # y @ W_out^T decomposed as a sum over heads of (tq, c) @ (c, C).
    acc_sc[...] += jnp.dot(y_ref[0, 0], w_ref[0],
                           preferred_element_type=jnp.float32)

    @pl.when(h == pl.num_programs(2) - 1)
    def _fin():
        o_ref[0] = acc_sc[...].astype(o_ref.dtype)


def _head_merge_output_proj(y_heads, wo_heads, tq):
    B, H, T, c = y_heads.shape
    C = H * c
    n_q = T // tq
    return pl.pallas_call(
        _outproj_kernel,
        out_shape=jax.ShapeDtypeStruct((B, T, C), y_heads.dtype),
        grid=(B, n_q, H),
        in_specs=[
            pl.BlockSpec((1, 1, tq, c), lambda b, qi, h: (b, h, qi, 0)),
            pl.BlockSpec((1, c, C), lambda b, qi, h: (h, 0, 0)),
        ],
        out_specs=pl.BlockSpec((1, tq, C), lambda b, qi, h: (b, qi, 0)),
        scratch_shapes=[pltpu.VMEM((tq, C), jnp.float32)],
        compiler_params=pltpu.CompilerParams(
            dimension_semantics=("parallel", "parallel", "arbitrary"),
            vmem_limit_bytes=_VMEM_LIMIT),
    )(y_heads, wo_heads)


# ------------------------------ wrapper ------------------------------
def mhcsa_forward(x, w_qkv, num_heads, w_out=None, include_output=False,
                  tq_pref=256, tkv_pref=512, tproj_pref=256):
    """Pallas implementation of MultiHeadedCausalSelfAttention.forward."""
    B, T, C = x.shape
    assert C % num_heads == 0
    H, c = num_heads, C // num_heads

    # One-time weight prep (outside the kernels, no in-kernel transposes).
    # w_qkv is the nn.Linear(C, 3C) weight, (3C, C); out = x @ w_qkv.T with
    # output features laid out per head as [Q_h | K_h | V_h].
    w3 = w_qkv.astype(jnp.float32).reshape(H, 3, c, C)      # [h, {q,k,v}, j, i]
    w_heads = jnp.transpose(w3, (0, 3, 1, 2)).reshape(H, C, 3 * c)  # (H, C, 3c)
    # Fold the 1/sqrt(head_size) attention scale into the Q columns.
    col_scale = jnp.concatenate([
        jnp.full((c,), 1.0 / (float(c) ** 0.5), jnp.float32),
        jnp.ones((2 * c,), jnp.float32)])
    w_heads = (w_heads * col_scale[None, None, :]).astype(x.dtype)

    tproj = _pick_tile(T, tproj_pref)
    tq = _pick_tile(T, tq_pref)
    tkv = _pick_tile(T, tkv_pref)

    q, k, v = _qkv_projection(x, w_heads, H, c, tproj)      # each (B, H, T, c)
    y_heads = _flash_attention(q, k, v, tq, tkv)            # (B, H, T, c)

    if include_output:
        wo_heads = jnp.transpose(w_out.astype(jnp.float32)).reshape(H, c, C)
        wo_heads = wo_heads.astype(x.dtype)
        return _head_merge_output_proj(y_heads, wo_heads, tq)

    # No output projection: re-interleave heads (pure layout, done in XLA).
    return jnp.transpose(y_heads, (0, 2, 1, 3)).reshape(B, T, C)


# ---------------------------- reference ----------------------------
def mhcsa_reference(x, w_qkv, num_heads, w_out=None, include_output=False):
    """Pure-JAX transliteration of the PyTorch forward (for verification)."""
    B, T, C = x.shape
    c = C // num_heads
    qkv = x @ w_qkv.T                                        # (B, T, 3C)
    qkv = qkv.reshape(B, T, num_heads, 3 * c).transpose(0, 2, 1, 3)
    q, k, v = qkv[..., :c], qkv[..., c:2 * c], qkv[..., 2 * c:]
    a = q @ jnp.swapaxes(k, -1, -2) / (float(c) ** 0.5)
    mask = jnp.where(jnp.tril(jnp.ones((T, T), jnp.float32)) > 0,
                     jnp.float32(0.0), -jnp.inf)
    a = a + mask
    p = jax.nn.softmax(a, axis=-1)
    y = p @ v
    y = jnp.swapaxes(y, 1, 2).reshape(B, T, C)
    if include_output:
        y = y @ w_out.T
    return y


if __name__ == "__main__":
    B, T, C, H = 2, 8, 32, 4

    key = jax.random.PRNGKey(0)
    kx, kw, ko = jax.random.split(key, 3)
    x = jax.random.normal(kx, (B, T, C), dtype=jnp.float32)
    # nn.Linear(C, 3C, bias=False) weight: (3C, C)
    w_qkv = jax.random.normal(kw, (3 * C, C), dtype=jnp.float32) * (C ** -0.5)
    # nn.Linear(C, C, bias=False) output weight: (C, C)
    w_out = jax.random.normal(ko, (C, C), dtype=jnp.float32) * (C ** -0.5)

    y = mhcsa_forward(x, w_qkv, H, w_out=w_out, include_output=True)
    y = jax.block_until_ready(y)
    y_ref = mhcsa_reference(x, w_qkv, H, w_out=w_out, include_output=True)
    assert y.shape == (B, T, C)
    assert jnp.allclose(y, y_ref, atol=2e-3, rtol=2e-3), \
        "mismatch vs reference (with output projection)"

    y2 = jax.block_until_ready(mhcsa_forward(x, w_qkv, H, include_output=False))
    y2_ref = mhcsa_reference(x, w_qkv, H, include_output=False)
    assert jnp.allclose(y2, y2_ref, atol=2e-3, rtol=2e-3), \
        "mismatch vs reference (no output projection)"

    print("KERNEL_OK")
</pallas_src>

<mosaic_0001>
module attributes {stable_mosaic.version = 11 : i64} {
  func.func @_proj_kernel(%arg0: i32, %arg1: i32, %arg2: i32, %arg3: memref<1x8x32xf32, #tpu.memory_space<vmem>>, %arg4: memref<1x32x24xf32, #tpu.memory_space<vmem>>, %arg5: memref<1x1x8x8xf32, #tpu.memory_space<vmem>>, %arg6: memref<1x1x8x8xf32, #tpu.memory_space<vmem>>, %arg7: memref<1x1x8x8xf32, #tpu.memory_space<vmem>>) attributes {dimension_semantics = [#tpu.dimension_semantics<parallel>, #tpu.dimension_semantics<parallel>, #tpu.dimension_semantics<arbitrary>], iteration_bounds = array<i64: 2, 1, 4>, scalar_prefetch = 0 : i64, scratch_operands = 0 : i64, tpu.core_type = #tpu.core_type<tc>, window_params = [{transform_indices = @transform_0, window_bounds = array<i64: 1, 8, 32>}, {transform_indices = @transform_1, window_bounds = array<i64: 1, 32, 24>}, {transform_indices = @transform_2, window_bounds = array<i64: 1, 1, 8, 8>}, {transform_indices = @transform_3, window_bounds = array<i64: 1, 1, 8, 8>}, {transform_indices = @transform_4, window_bounds = array<i64: 1, 1, 8, 8>}]} {
    %c0 = arith.constant 0 : index
    %c0_0 = arith.constant 0 : index
    %c0_1 = arith.constant 0 : index
    %0 = vector.load %arg3[%c0, %c0_0, %c0_1] : memref<1x8x32xf32, #tpu.memory_space<vmem>>, vector<1x8x32xf32>
    %1 = vector.shape_cast %0 : vector<1x8x32xf32> to vector<8x32xf32>
    %c0_2 = arith.constant 0 : index
    %c0_3 = arith.constant 0 : index
    %c0_4 = arith.constant 0 : index
    %2 = vector.load %arg4[%c0_2, %c0_3, %c0_4] : memref<1x32x24xf32, #tpu.memory_space<vmem>>, vector<1x32x24xf32>
    %3 = vector.shape_cast %2 : vector<1x32x24xf32> to vector<32x24xf32>
    %cst = arith.constant dense<0.000000e+00> : vector<8x24xf32>
    %4 = tpu.matmul %1, %3, %cst {dimension_numbers = #tpu.dot_dimension_numbers<[1], [0], [0], [1], [0, 0, 1, 1], [], []>} : vector<8x32xf32>, vector<32x24xf32>, vector<8x24xf32> -> vector<8x24xf32>
    %5 = vector.extract_strided_slice %4 {offsets = [0, 0], sizes = [8, 8], strides = [1, 1]} : vector<8x24xf32> to vector<8x8xf32>
    %c0_5 = arith.constant 0 : index
    %c0_6 = arith.constant 0 : index
    %c0_7 = arith.constant 0 : index
    %c0_8 = arith.constant 0 : index
    %6 = vector.load %arg5[%c0_5, %c0_6, %c0_7, %c0_8] : memref<1x1x8x8xf32, #tpu.memory_space<vmem>>, vector<1x1x8x8xf32>
    %7 = vector.shape_cast %6 : vector<1x1x8x8xf32> to vector<8x8xf32>
    %8 = vector.shape_cast %5 : vector<8x8xf32> to vector<1x1x8x8xf32>
    tpu.vector_store %arg5[%c0_5, %c0_6, %c0_7, %c0_8], %8 {strides = array<i32>} : memref<1x1x8x8xf32, #tpu.memory_space<vmem>>, vector<1x1x8x8xf32>,
    %9 = vector.extract_strided_slice %4 {offsets = [0, 8], sizes = [8, 8], strides = [1, 1]} : vector<8x24xf32> to vector<8x8xf32>
    %c0_9 = arith.constant 0 : index
    %c0_10 = arith.constant 0 : index
    %c0_11 = arith.constant 0 : index
    %c0_12 = arith.constant 0 : index
    %10 = vector.load %arg6[%c0_9, %c0_10, %c0_11, %c0_12] : memref<1x1x8x8xf32, #tpu.memory_space<vmem>>, vector<1x1x8x8xf32>
    %11 = vector.shape_cast %10 : vector<1x1x8x8xf32> to vector<8x8xf32>
    %12 = vector.shape_cast %9 : vector<8x8xf32> to vector<1x1x8x8xf32>
    tpu.vector_store %arg6[%c0_9, %c0_10, %c0_11, %c0_12], %12 {strides = array<i32>} : memref<1x1x8x8xf32, #tpu.memory_space<vmem>>, vector<1x1x8x8xf32>,
    %13 = vector.extract_strided_slice %4 {offsets = [0, 16], sizes = [8, 8], strides = [1, 1]} : vector<8x24xf32> to vector<8x8xf32>
    %c0_13 = arith.constant 0 : index
    %c0_14 = arith.constant 0 : index
    %c0_15 = arith.constant 0 : index
    %c0_16 = arith.constant 0 : index
    %14 = vector.load %arg7[%c0_13, %c0_14, %c0_15, %c0_16] : memref<1x1x8x8xf32, #tpu.memory_space<vmem>>, vector<1x1x8x8xf32>
    %15 = vector.shape_cast %14 : vector<1x1x8x8xf32> to vector<8x8xf32>
    %16 = vector.shape_cast %13 : vector<8x8xf32> to vector<1x1x8x8xf32>
    tpu.vector_store %arg7[%c0_13, %c0_14, %c0_15, %c0_16], %16 {strides = array<i32>} : memref<1x1x8x8xf32, #tpu.memory_space<vmem>>, vector<1x1x8x8xf32>,
    return
  }
  func.func @transform_0(%arg0: i32, %arg1: i32, %arg2: i32) -> (i32, i32, i32) {
    %c0_i32 = arith.constant 0 : i32
    %c0_i32_0 = arith.constant 0 : i32
    return %arg0, %arg1, %c0_i32 : i32, i32, i32
  }
  func.func @transform_1(%arg0: i32, %arg1: i32, %arg2: i32) -> (i32, i32, i32) {
    %c0_i32 = arith.constant 0 : i32
    %c0_i32_0 = arith.constant 0 : i32
    %c0_i32_1 = arith.constant 0 : i32
    return %arg2, %c0_i32, %c0_i32_0 : i32, i32, i32
  }
  func.func @transform_2(%arg0: i32, %arg1: i32, %arg2: i32) -> (i32, i32, i32, i32) {
    %c0_i32 = arith.constant 0 : i32
    %c0_i32_0 = arith.constant 0 : i32
    return %arg0, %arg2, %arg1, %c0_i32 : i32, i32, i32, i32
  }
  func.func @transform_3(%arg0: i32, %arg1: i32, %arg2: i32) -> (i32, i32, i32, i32) {
    %c0_i32 = arith.constant 0 : i32
    %c0_i32_0 = arith.constant 0 : i32
    return %arg0, %arg2, %arg1, %c0_i32 : i32, i32, i32, i32
  }
  func.func @transform_4(%arg0: i32, %arg1: i32, %arg2: i32) -> (i32, i32, i32, i32) {
    %c0_i32 = arith.constant 0 : i32
    %c0_i32_0 = arith.constant 0 : i32
    return %arg0, %arg2, %arg1, %c0_i32 : i32, i32, i32, i32
  }
}

</mosaic_0001>

<llo_original>
// kernel: tpu_custom_call.1
$region0: #{tpu_custom_call.1}
  #allocation0 [shape = 'u32[]', space=smem, size = 0x4, offset = 0x4, fixed_abs, tag = 'smem constant byte address 0x4 - core index']
  #allocation1 [shape = 'u32[144,128]{1,0:T(1,128)}', space=vmem, size = 0x12000, scoped, tag = 'internal scratch']
  %s0 = inlined_call_operand.vmem [shape: f32[2,8,32], index: 0, kind: input, shape index: {}]
  %s1 = inlined_call_operand.vmem [shape: f32[4,32,24], index: 1, kind: input, shape index: {}]
  %s2 = inlined_call_operand.hbm [shape: f32[2,4,8,8], index: 2, kind: output, shape index: {0}]
  %s3 = inlined_call_operand.hbm [shape: f32[2,4,8,8], index: 3, kind: output, shape index: {1}]
  %s4 = inlined_call_operand.hbm [shape: f32[2,4,8,8], index: 4, kind: output, shape index: {2}]
  %5 = xla_tuple %s2, %s3, %s4
  %s6 = sld [smem:[#allocation0]]
  $region57: #{tpu_custom_call.1} parent=0
    _
  %s8 = ssub.s32 1, %s6
  %s9 = scalar_select 0, %s8, %s6
  $region1: #{tpu_custom_call.1} parent=0
    #allocation2 [shape = 'u8[8192]{0}', space=vmem, size = 0x2000, scoped, tag = 'output window, operand 0']
    #allocation3 [shape = 's32[2]{0}', space=sflag, size = 0x8, scoped, tag = 'scoped memory for tpu_custom_call.1']
    #allocation4 [shape = 'u8[8192]{0}', space=vmem, size = 0x2000, scoped, tag = 'output window, operand 1']
    #allocation5 [shape = 's32[2]{0}', space=sflag, size = 0x8, scoped, tag = 'scoped memory for tpu_custom_call.1']
    #allocation6 [shape = 'u8[8192]{0}', space=vmem, size = 0x2000, scoped, tag = 'output window, operand 2']
    %10 = vsyncpa [#allocation3], 0
    %s11 = scalar_lea.sflag [#allocation3], 1
    %12 = vsyncpa %s11, 0
    %13 = vsyncpa [#allocation5], 0
    %s14 = scalar_lea.sflag [#allocation5], 1
    %15 = vsyncpa %s14, 0
    loop: start=0, step=1, limit=10
    $region2: #{tpu_custom_call.1} parent=1 // loop_pre_header
      _
    $region3: #{tpu_custom_call.1} parent=1 // loop_header
      %s17 = sphi 0, %s21
      %p18 = scmp.ge.s32.totalorder %s17, 10
      %s24 = sphi 0, %s43
      %s25 = sphi 0, %s39
      %s26 = sphi 0, %s35
      %s27 = sphi 0, %s24
      %s28 = sphi 0, %s25
      %s29 = sphi 0, %s26
      %s30 = sphi 0, %s27
      %s31 = sphi 0, %s28
      %s32 = sphi 0, %s29
      %s48 = sphi 0, %s50
      %s51 = sphi 0, %s48
      %s52 = sphi 0, %s51
      %s68 = sphi 0, %s52
      %s74 = sphi 0, %s76
      %s77 = sphi 0, %s74
      %s78 = sphi 0, %s77
      %s94 = sphi 0, %s78
      %s104 = sphi 0, %s106
      %s107 = sphi 0, %s104
      %s108 = sphi 0, %s107
      %s124 = sphi 0, %s108
      %s134 = sphi 0, %s136
      %s137 = sphi 0, %s134
      %s138 = sphi 0, %s137
      %s154 = sphi 0, %s138
      %s164 = sphi 0, %s166
      %s167 = sphi 0, %s164
      %s168 = sphi 0, %s167
      %s184 = sphi 0, %s168
    $region4: #{tpu_custom_call.1} parent=1 // loop_header_branch
      %20 = sbr.rel (%p18) target = $region8
    $region5: #{tpu_custom_call.1} parent=1 // loop_body
      %s22 = ssub.s32 %s17, 1
      %s23 = ssub.s32 %s17, 2
      %s33 = sadd.s32 1, %s26
      %p34 = scmp.ge.s32.totalorder %s33, 4
      %s35 = scalar_select %p34, 0, %s33
      %s36 = sadd.s32 1, %s25
      %s37 = scalar_select %p34, %s36, %s25
      %p38 = scmp.ge.s32.totalorder %s37, 1
      %s39 = scalar_select %p38, 0, %s37
      %s40 = sadd.s32 1, %s24
      %s41 = scalar_select %p38, %s40, %s24
      %p42 = scmp.ge.s32.totalorder %s41, 2
      %s43 = scalar_select %p42, 0, %s41
      %s44 = ssub.s32 %s24, %s43
      %s45 = ssub.s32 %s25, %s39
      %s46 = sor.u32 %s44, %s45
      %p47 = scmp.eq.s32.totalorder %s46, 0
      %s49 = sadd.s32 %s48, 1
      %s50 = scalar_select %p47, %s48, %s49
      %p53 = pneg %p47
      %p54 = scmp.eq.s32.totalorder %s17, 7
      %p55 = por %p53, %p54
      %p56 = scmp.ne.s32.totalorder %s48, %s51
      %p57 = scmp.eq.s32.totalorder %s17, 0
      %p58 = por %p56, %p57
      %p59 = scmp.ne.s32.totalorder %s48, %s51
      %p60 = scmp.eq.s32.totalorder %s22, 7
      %p61 = por %p59, %p60
      %p62 = scmp.ne.s32.totalorder %s51, %s52
      %p63 = scmp.eq.s32.totalorder %s22, 0
      %p64 = por %p62, %p63
      %p65 = scmp.ne.s32.totalorder %s51, %s52
      %p66 = scmp.eq.s32.totalorder %s23, 7
      %p67 = por %p65, %p66
      %p69 = scmp.ne.s32.totalorder %s52, %s68
      %p70 = scmp.eq.s32.totalorder %s23, 0
      %p71 = por %p69, %p70
      %s72 = ssub.s32 %s26, %s35
      %p73 = scmp.eq.s32.totalorder %s72, 0
      %s75 = sadd.s32 %s74, 1
      %s76 = scalar_select %p73, %s74, %s75
      %p79 = pneg %p73
      %p80 = scmp.eq.s32.totalorder %s17, 7
      %p81 = por %p79, %p80
      %p82 = scmp.ne.s32.totalorder %s74, %s77
      %p83 = scmp.eq.s32.totalorder %s17, 0
      %p84 = por %p82, %p83
      %p85 = scmp.ne.s32.totalorder %s74, %s77
      %p86 = scmp.eq.s32.totalorder %s22, 7
      %p87 = por %p85, %p86
      %p88 = scmp.ne.s32.totalorder %s77, %s78
      %p89 = scmp.eq.s32.totalorder %s22, 0
      %p90 = por %p88, %p89
      %p91 = scmp.ne.s32.totalorder %s77, %s78
      %p92 = scmp.eq.s32.totalorder %s23, 7
      %p93 = por %p91, %p92
      %p95 = scmp.ne.s32.totalorder %s78, %s94
      %p96 = scmp.eq.s32.totalorder %s23, 0
      %p97 = por %p95, %p96
      %s98 = ssub.s32 %s24, %s43
      %s99 = ssub.s32 %s26, %s35
      %s100 = sor.u32 %s98, %s99
      %s101 = ssub.s32 %s25, %s39
      %s102 = sor.u32 %s100, %s101
      %p103 = scmp.eq.s32.totalorder %s102, 0
      %s105 = sadd.s32 %s104, 1
      %s106 = scalar_select %p103, %s104, %s105
      %p109 = pneg %p103
      %p110 = scmp.eq.s32.totalorder %s17, 7
      %p111 = por %p109, %p110
      %p112 = scmp.ne.s32.totalorder %s104, %s107
      %p113 = scmp.eq.s32.totalorder %s17, 0
      %p114 = por %p112, %p113
      %p115 = scmp.ne.s32.totalorder %s104, %s107
      %p116 = scmp.eq.s32.totalorder %s22, 7
      %p117 = por %p115, %p116
      %p118 = scmp.ne.s32.totalorder %s107, %s108
      %p119 = scmp.eq.s32.totalorder %s22, 0
      %p120 = por %p118, %p119
      %p121 = scmp.ne.s32.totalorder %s107, %s108
      %p122 = scmp.eq.s32.totalorder %s23, 7
      %p123 = por %p121, %p122
      %p125 = scmp.ne.s32.totalorder %s108, %s124
      %p126 = scmp.eq.s32.totalorder %s23, 0
      %p127 = por %p125, %p126
      %s128 = ssub.s32 %s24, %s43
      %s129 = ssub.s32 %s26, %s35
      %s130 = sor.u32 %s128, %s129
      %s131 = ssub.s32 %s25, %s39
      %s132 = sor.u32 %s130, %s131
      %p133 = scmp.eq.s32.totalorder %s132, 0
      %s135 = sadd.s32 %s134, 1
      %s136 = scalar_select %p133, %s134, %s135
      %p139 = pneg %p133
      %p140 = scmp.eq.s32.totalorder %s17, 7
      %p141 = por %p139, %p140
      %p142 = scmp.ne.s32.totalorder %s134, %s137
      %p143 = scmp.eq.s32.totalorder %s17, 0
      %p144 = por %p142, %p143
      %p145 = scmp.ne.s32.totalorder %s134, %s137
      %p146 = scmp.eq.s32.totalorder %s22, 7
      %p147 = por %p145, %p146
      %p148 = scmp.ne.s32.totalorder %s137, %s138
      %p149 = scmp.eq.s32.totalorder %s22, 0
      %p150 = por %p148, %p149
      %p151 = scmp.ne.s32.totalorder %s137, %s138
      %p152 = scmp.eq.s32.totalorder %s23, 7
      %p153 = por %p151, %p152
      %p155 = scmp.ne.s32.totalorder %s138, %s154
      %p156 = scmp.eq.s32.totalorder %s23, 0
      %p157 = por %p155, %p156
      %s158 = ssub.s32 %s24, %s43
      %s159 = ssub.s32 %s26, %s35
      %s160 = sor.u32 %s158, %s159
      %s161 = ssub.s32 %s25, %s39
      %s162 = sor.u32 %s160, %s161
      %p163 = scmp.eq.s32.totalorder %s162, 0
      %s165 = sadd.s32 %s164, 1
      %s166 = scalar_select %p163, %s164, %s165
      %p169 = pneg %p163
      %p170 = scmp.eq.s32.totalorder %s17, 7
      %p171 = por %p169, %p170
      %p172 = scmp.ne.s32.totalorder %s164, %s167
      %p173 = scmp.eq.s32.totalorder %s17, 0
      %p174 = por %p172, %p173
      %p175 = scmp.ne.s32.totalorder %s164, %s167
      %p176 = scmp.eq.s32.totalorder %s22, 7
      %p177 = por %p175, %p176
      %p178 = scmp.ne.s32.totalorder %s167, %s168
      %p179 = scmp.eq.s32.totalorder %s22, 0
      %p180 = por %p178, %p179
      %p181 = scmp.ne.s32.totalorder %s167, %s168
      %p182 = scmp.eq.s32.totalorder %s23, 7
      %p183 = por %p181, %p182
      %p185 = scmp.ne.s32.totalorder %s168, %s184
      %p186 = scmp.eq.s32.totalorder %s23, 0
      %p187 = por %p185, %p186
      %p188 = scmp.le.s32.totalorder 1, %s17
      %p189 = scmp.lt.s32.totalorder %s17, 9
      %p190 = pnand %p188, %p189
      %p191 = pneg %p190
      // Predicated region
      $region9: #{tpu_custom_call.1} parent=5 // pred_check
        _
      $region10: #{tpu_custom_call.1} parent=5 // pred_check_branch
        %193 = sbr.rel (%p190) target = $region12
      $region11: #{tpu_custom_call.1} parent=5 // pred_region
        %s194 = ssub.s32 %s17, 1
      $region12: #{tpu_custom_call.1} parent=5 // pred_fallthru
        _
      %p195 = scmp.lt.s32.totalorder %s17, 8
      // Predicated region
      $region13: #{tpu_custom_call.1} parent=5 // pred_check
        %p196 = pneg %p195
      $region14: #{tpu_custom_call.1} parent=5 // pred_check_branch
        %198 = sbr.rel (%p196) target = $region16
      $region15: #{tpu_custom_call.1} parent=5 // pred_region
        // Predicated region
        $region17: #{tpu_custom_call.1} parent=15 // pred_check
          %p199 = pneg %p58
        $region18: #{tpu_custom_call.1} parent=15 // pred_check_branch
          %201 = sbr.rel (%p199) target = $region20
        $region19: #{tpu_custom_call.1} parent=15 // pred_region
          %p202 = scmp.lt.s32.totalorder %s24, 1
          %s203 = scalar_select %p202, %s24, 1
          %p204 = scmp.lt.s32.totalorder %s25, 0
          %s205 = scalar_select %p204, %s25, 0
          %s206 = sadd.s32 %s205, %s203
          %s207 = smul.addr %s206, 8
          %s208 = scalar_lea.vmem %s0, %s207
        $region20: #{tpu_custom_call.1} parent=15 // pred_fallthru
          _
        // Predicated region
        $region21: #{tpu_custom_call.1} parent=15 // pred_check
          %p209 = pneg %p84
        $region22: #{tpu_custom_call.1} parent=15 // pred_check_branch
          %211 = sbr.rel (%p209) target = $region24
        $region23: #{tpu_custom_call.1} parent=15 // pred_region
          %p212 = scmp.lt.s32.totalorder %s26, 3
          %s213 = scalar_select %p212, %s26, 3
          %s214 = smul.addr %s213, 4
          %s215 = smul.addr %s214, 8
          %s216 = scalar_lea.vmem %s1, %s215
        $region24: #{tpu_custom_call.1} parent=15 // pred_fallthru
          _
      $region16: #{tpu_custom_call.1} parent=5 // pred_fallthru
        _
      %p217 = scmp.le.s32.totalorder 1, %s17
      %p218 = scmp.lt.s32.totalorder %s17, 9
      %p219 = pnand %p217, %p218
      %p220 = pneg %p219
      // Predicated region
      $region25: #{tpu_custom_call.1} parent=5 // pred_check
        _
      $region26: #{tpu_custom_call.1} parent=5 // pred_check_branch
        %222 = sbr.rel (%p219) target = $region28
      $region27: #{tpu_custom_call.1} parent=5 // pred_region
        %s223 = ssub.s32 %s17, 1
        %p224 = scmp.lt.s32.totalorder %s27, 1
        %s225 = scalar_select %p224, %s27, 1
        %p226 = scmp.lt.s32.totalorder %s28, 0
        %s227 = scalar_select %p226, %s28, 0
        %s228 = sadd.s32 %s227, %s225
        %s229 = smul.addr %s228, 8
        %s230 = scalar_lea.vmem %s0, %s229
        %p231 = pneg %p64
        %p232 = pneg %p61
        %p233 = scmp.lt.s32.totalorder %s29, 3
        %s234 = scalar_select %p233, %s29, 3
        %s235 = smul.addr %s234, 4
        %s236 = smul.addr %s235, 8
        %s237 = scalar_lea.vmem %s1, %s236
        %p238 = pneg %p90
        %p239 = pneg %p87
        %p240 = pneg %p120
        %p241 = pneg %p117
        %s242 = sand.u32 %s107, 1
        %s243 = scalar_lea.sflag [#allocation3], %s242
        %s244 = sand.u32 %s107, 1
        %s245 = smul.addr %s244, 8
        %s246 = scalar_lea.vmem [#allocation2], %s245
        %p247 = pneg %p150
        %p248 = pneg %p147
        %s249 = sand.u32 %s22, 1
        %s250 = scalar_lea.sflag [#allocation5], %s249
        %s251 = sand.u32 %s137, 1
        %s252 = smul.addr %s251, 8
        %s253 = scalar_lea.vmem [#allocation4], %s252
        %p254 = pneg %p180
        %p255 = pneg %p177
        %s256 = sand.u32 %s22, 1
        %s257 = scalar_lea.sflag [#allocation5], %s256
        %s258 = sand.u32 %s167, 1
        %s259 = smul.addr %s258, 8
        %s260 = scalar_lea.vmem [#allocation6], %s259
        %p261 = scmp.lt.s32.totalorder %s27, 1
        %s262 = scalar_select %p261, %s27, 1
        %p263 = scmp.lt.s32.totalorder %s28, 0
        %s264 = scalar_select %p263, %s28, 0
        %s265 = sadd.s32 %s264, %s262
        %s266 = smul.addr %s265, 8
        %s267 = scalar_lea.vmem %s0, %s266
        %p268 = scmp.lt.s32.totalorder %s29, 3
        %s269 = scalar_select %p268, %s29, 3
        %s270 = smul.addr %s269, 4
        %s271 = smul.addr %s270, 8
        %s272 = scalar_lea.vmem %s1, %s271
        %v273 = vld [vmem:[%s267] sm:$0xff]
        %v274 = vld [vmem:[%s272] sm:$0xff]
        %v275 = vld [vmem:[%s272 + $0x8] sm:$0xff]
        %v276 = vld [vmem:[%s272 + $0x10] sm:$0xff]
        %v277 = vld [vmem:[%s272 + $0x18] sm:$0xff]
        %vm278 = vcmask 261120
        %v280 = vsel %vm278, %v273, 0
        %282 = vmatprep.subr.mxu0 0.0
        %283 = vmatpush1.msra.mxu0 %v274
        %284 = vmatprep.subr.mxu0 0.0
        %285 = vmatpush1.msra.mxu0 %v275
        %286 = vmatprep.subr.mxu0 0.0
        %287 = vmatpush1.msra.mxu0 %v276
        %288 = vmatprep.subr.mxu0 0.0
        %289 = vmatpush1.msra.mxu0 %v277
        %290 = vmatprep.subr.mxu0 0.0
        %291 = vmatpush1.msra.mxu0 0.0
        %292 = vmatprep.subr.mxu0 0.0
        %293 = vmatpush1.msra.mxu0 0.0
        %294 = vmatprep.subr.mxu0 0.0
        %295 = vmatpush1.msra.mxu0 0.0
        %296 = vmatprep.subr.mxu0 0.0
        %297 = vmatpush1.msra.mxu0 0.0
        %298 = vmatprep.subr.mxu0 0.0
        %299 = vmatpush1.msra.mxu0 0.0
        %300 = vmatprep.subr.mxu0 0.0
        %301 = vmatpush1.msra.mxu0 0.0
        %302 = vmatprep.subr.mxu0 0.0
        %303 = vmatpush1.msra.mxu0 0.0
        %304 = vmatprep.subr.mxu0 0.0
        %305 = vmatpush1.msra.mxu0 0.0
        %306 = vmatprep.subr.mxu0 0.0
        %307 = vmatpush1.msra.mxu0 0.0
        %308 = vmatprep.subr.mxu0 0.0
        %309 = vmatpush1.msra.mxu0 0.0
        %310 = vmatprep.subr.mxu0 0.0
        %311 = vmatpush1.msra.mxu0 0.0
        %312 = vmatprep.subr.mxu0 0.0
        %313 = vmatpush1.msra.mxu0 0.0
        %314 = vmatprep.subr.mxu0 0.0
        %315 = vmatpush1.msra.mxu0 0.0
        %316 = vmatprep.subr.mxu0 0.0
        %317 = vmatpush1.msra.mxu0 0.0
        %318 = vmatprep.subr.mxu0 0.0
        %319 = vmatpush1.msra.mxu0 0.0
        %320 = vmatprep.subr.mxu0 0.0
        %321 = vmatpush1.msra.mxu0 0.0
        %322 = vmatprep.subr.mxu0 0.0
        %323 = vmatpush1.msra.mxu0 0.0
        %324 = vmatprep.subr.mxu0 0.0
        %325 = vmatpush1.msra.mxu0 0.0
        %326 = vmatprep.subr.mxu0 0.0
        %327 = vmatpush1.msra.mxu0 0.0
        %328 = vmatprep.subr.mxu0 0.0
        %329 = vmatpush1.msra.mxu0 0.0
        %330 = vmatprep.subr.mxu0 0.0
        %331 = vmatpush1.msra.mxu0 0.0
        %332 = vmatprep.subr.mxu0 0.0
        %333 = vmatpush1.msra.mxu0 0.0
        %334 = vmatprep.subr.mxu0 0.0
        %335 = vmatpush1.msra.mxu0 0.0
        %336 = vmatprep.subr.mxu0 0.0
        %337 = vmatpush1.msra.mxu0 0.0
        %338 = vmatprep.subr.mxu0 0.0
        %339 = vmatpush1.msra.mxu0 0.0
        %340 = vmatprep.subr.mxu0 0.0
        %341 = vmatpush1.msra.mxu0 0.0
        %342 = vmatprep.subr.mxu0 0.0
        %343 = vmatpush1.msra.mxu0 0.0
        %344 = vmatprep.subr.mxu0 0.0
        %345 = vmatpush1.msra.mxu0 0.0
        %346 = vmatprep.mubr.f32.mxu0 0.0
        %347 = vmatmul.mubr.f32.gmra.mrb[0].mxu0 %v280
        %v348 = vpop.f32.mrb[0].mxu0
        %v349 = vadd.f32 0.0, %v348
        %v350 = vpop.f32.mrb[0].mxu0
        %351 = vdwg.mxu0
        %vm352 = vcmask 64512
        %353 = vst.msk [vmem:[%s246] sm:$0xff] %vm352, %v349
        %355 = vrot.lane.b32.xlu0 %v349, 120
        %v356 = vpop.permute.xlu0 %355
        %358 = vst.msk [vmem:[%s253] sm:$0xff] %vm352, %v356
        %359 = vrot.lane.b32.xlu0 %v349, 112
        %v360 = vpop.permute.xlu0 %359
        %362 = vst.msk [vmem:[%s260] sm:$0xff] %vm352, %v360
        %s363 = sand.u32 %s107, 1
        %s364 = scalar_lea.sflag [#allocation3], %s363
        %s365 = sand.u32 %s107, 1
        %s366 = smul.addr %s365, 8
        %s367 = scalar_lea.vmem [#allocation2], %s366
        %s368 = sand.u32 %s22, 1
        %s369 = scalar_lea.sflag [#allocation5], %s368
        %s370 = sand.u32 %s137, 1
        %s371 = smul.addr %s370, 8
        %s372 = scalar_lea.vmem [#allocation4], %s371
        %s373 = sand.u32 %s22, 1
        %s374 = scalar_lea.sflag [#allocation5], %s373
        %s375 = sand.u32 %s167, 1
        %s376 = smul.addr %s375, 8
        %s377 = scalar_lea.vmem [#allocation6], %s376
        // Predicated region
        $region29: #{tpu_custom_call.1} parent=27 // pred_check
          %p378 = pneg %p117
        $region30: #{tpu_custom_call.1} parent=27 // pred_check_branch
          %380 = sbr.rel (%p378) target = $region32
        $region31: #{tpu_custom_call.1} parent=27 // pred_region
          %s382 = ssub.s32 128, 128
          %383 = vsyncadd %s364, %s382
          %s384 = sadd.s32 %s28, %s29
          %s385 = smul.addr %s27, 4
          %s386 = sadd.s32 %s384, %s385
          %s387 = smul.addr %s386, 128
          %s388 = scalar_lea.hbm %s2, %s387
          %s390 = sshll.u32 %s367, 4
          %s391 = int_to_ptr.vmem [resolvable:$true] %s390
          %393 = dma.vmem_to_hbm [thread:$0]  %s391, 128, %s388, %s364
        $region32: #{tpu_custom_call.1} parent=27 // pred_fallthru
          _
        // Predicated region
        $region33: #{tpu_custom_call.1} parent=27 // pred_check
          %p394 = pneg %p147
        $region34: #{tpu_custom_call.1} parent=27 // pred_check_branch
          %396 = sbr.rel (%p394) target = $region36
        $region35: #{tpu_custom_call.1} parent=27 // pred_region
          %s398 = ssub.s32 128, 128
          %399 = vsyncadd %s369, %s398
          %s400 = sadd.s32 %s28, %s29
          %s401 = smul.addr %s27, 4
          %s402 = sadd.s32 %s400, %s401
          %s403 = smul.addr %s402, 128
          %s404 = scalar_lea.hbm %s3, %s403
          %s406 = sshll.u32 %s372, 4
          %s407 = int_to_ptr.vmem [resolvable:$true] %s406
          %409 = dma.vmem_to_hbm [thread:$0]  %s407, 128, %s404, %s369
        $region36: #{tpu_custom_call.1} parent=27 // pred_fallthru
          _
        // Predicated region
        $region37: #{tpu_custom_call.1} parent=27 // pred_check
          %p410 = pneg %p177
        $region38: #{tpu_custom_call.1} parent=27 // pred_check_branch
          %412 = sbr.rel (%p410) target = $region40
        $region39: #{tpu_custom_call.1} parent=27 // pred_region
          %s414 = ssub.s32 128, 128
          %415 = vsyncadd %s374, %s414
          %s416 = sadd.s32 %s28, %s29
          %s417 = smul.addr %s27, 4
          %s418 = sadd.s32 %s416, %s417
          %s419 = smul.addr %s418, 128
          %s420 = scalar_lea.hbm %s4, %s419
          %s422 = sshll.u32 %s377, 4
          %s423 = int_to_ptr.vmem [resolvable:$true] %s422
          %425 = dma.vmem_to_hbm [thread:$0]  %s423, 128, %s420, %s374
        $region40: #{tpu_custom_call.1} parent=27 // pred_fallthru
          _
      $region28: #{tpu_custom_call.1} parent=5 // pred_fallthru
        _
      %p426 = scmp.le.s32.totalorder 2, %s17
      // Predicated region
      $region41: #{tpu_custom_call.1} parent=5 // pred_check
        %p427 = pneg %p426
      $region42: #{tpu_custom_call.1} parent=5 // pred_check_branch
        %429 = sbr.rel (%p427) target = $region44
      $region43: #{tpu_custom_call.1} parent=5 // pred_region
        %s430 = ssub.s32 %s17, 2
        // Predicated region
        $region45: #{tpu_custom_call.1} parent=43 // pred_check
          %p431 = pneg %p123
        $region46: #{tpu_custom_call.1} parent=43 // pred_check_branch
          %433 = sbr.rel (%p431) target = $region48
        $region47: #{tpu_custom_call.1} parent=43 // pred_region
          %s434 = sand.u32 %s108, 1
          %s435 = scalar_lea.sflag [#allocation3], %s434
          %s436 = sand.u32 %s108, 1
          %s437 = smul.addr %s436, 8
          %s438 = scalar_lea.vmem [#allocation2], %s437
          %439 = dma.done %s435, 128
        $region48: #{tpu_custom_call.1} parent=43 // pred_fallthru
          _
        // Predicated region
        $region49: #{tpu_custom_call.1} parent=43 // pred_check
          %p440 = pneg %p153
        $region50: #{tpu_custom_call.1} parent=43 // pred_check_branch
          %442 = sbr.rel (%p440) target = $region52
        $region51: #{tpu_custom_call.1} parent=43 // pred_region
          %s443 = sand.u32 %s23, 1
          %s444 = scalar_lea.sflag [#allocation5], %s443
          %s445 = sand.u32 %s138, 1
          %s446 = smul.addr %s445, 8
          %s447 = scalar_lea.vmem [#allocation4], %s446
          %448 = dma.done %s444, 128
        $region52: #{tpu_custom_call.1} parent=43 // pred_fallthru
          _
        // Predicated region
        $region53: #{tpu_custom_call.1} parent=43 // pred_check
          %p449 = pneg %p183
        $region54: #{tpu_custom_call.1} parent=43 // pred_check_branch
          %451 = sbr.rel (%p449) target = $region56
        $region55: #{tpu_custom_call.1} parent=43 // pred_region
          %s452 = sand.u32 %s23, 1
          %s453 = scalar_lea.sflag [#allocation5], %s452
          %s454 = sand.u32 %s168, 1
          %s455 = smul.addr %s454, 8
          %s456 = scalar_lea.vmem [#allocation6], %s455
          %457 = dma.done %s453, 128
        $region56: #{tpu_custom_call.1} parent=43 // pred_fallthru
          _
      $region44: #{tpu_custom_call.1} parent=5 // pred_fallthru
        _
    $region6: #{tpu_custom_call.1} parent=1 // loop_footer
      %s21 = sadd.s32 1, %s17
    $region7: #{tpu_custom_call.1} parent=1 // loop_footer_branch
      %16 = sbr.rel target = $region3
    $region8: #{tpu_custom_call.1} parent=1 // loop_exit
      _
    %458 = vsyncpa [#allocation3], 1
    %s459 = scalar_lea.sflag [#allocation3], 1
    %460 = vsyncpa %s459, 1
    %461 = vsyncpa [#allocation5], 1
    %s462 = scalar_lea.sflag [#allocation5], 1
    %463 = vsyncpa %s462, 1

</llo_original>
